<compile_context>
chip_gen: v6e
topology: v6e:2x2x1
jax: 0.10.0
libtpu: 0.0.40
codegen_flags: <defaults>
</compile_context>

<pallas_src>
import functools

import jax
import jax.numpy as jnp
from jax.experimental import pallas as pl
from jax.experimental.pallas import tpu as pltpu

# ---- module hyper-parameters ----
g_dim = 256
z_size = 100
# keys_size / MAX_KEYPRESSES are undefined in the source file; pick small
# consistent values (same ones used previously).
keys_size = 8
MAX_KEYPRESSES = 7
M_SOFT = MAX_KEYPRESSES + 1            # softmax group length (dim=2)  -> 8
OUT_FEATURES = keys_size * M_SOFT      # 64  (real output features)
OUT_PAD = 128                          # output padded to a lane-dense 128
Z_PAD = 128                            # latent padded to a lane-dense 128
BN_EPS = 1e-5
NEG_SLOPE = 0.2


def _leaky_relu(x):
    # max(x, 0.2*x): 2 VPU ops instead of cmp+mul+select.
    return jnp.maximum(x, NEG_SLOPE * x)


def _round_up(x, n):
    return (x + n - 1) // n * n


def generator_kernel(x_ref,
                     w1_ref, b1_ref,
                     w2_ref, shift2_ref,
                     w3_ref, b3_ref,
                     s_ref,
                     out_ref):
    """One batch tile of the full Generator MLP.

    x_ref:      (TB, 128)    bf16 latent (zero-padded 100 -> 128)
    w1_ref:     (128, 256)   bf16
    b1_ref:     (1, 256)     f32
    w2_ref:     (256, 512)   bf16, eval-BN scale folded in
    shift2_ref: (1, 512)     f32, b2*bn_scale + bn_shift
    w3_ref:     (512, 128)   bf16, zero-padded 64 -> 128 output columns
    b3_ref:     (1, 128)     f32, zero-padded
    s_ref:      (128, 128)   f32 block-diagonal ones (8x8 blocks): group-sum matrix
    out_ref:    (TB, 128)    f32 softmax probabilities (first 64 lanes are real)
    """
    # ---- Layer 1: Linear(z, g_dim) + LeakyReLU(0.2) ----
    h = jnp.dot(x_ref[...], w1_ref[...], preferred_element_type=jnp.float32)
    h = _leaky_relu(h + b1_ref[...])

    # ---- Layer 2: Linear(g_dim, 2*g_dim) + eval-BN (folded) + LeakyReLU ----
    h = jnp.dot(h.astype(jnp.bfloat16), w2_ref[...],
                preferred_element_type=jnp.float32)
    h = _leaky_relu(h + shift2_ref[...])

    # ---- Layer 3: Linear(2*g_dim, 64) padded to 128 lanes ----
    logits = jnp.dot(h.astype(jnp.bfloat16), w3_ref[...],
                     preferred_element_type=jnp.float32)
    logits = logits + b3_ref[...]        # padded lanes: logits == 0

    # ---- Unflatten + Softmax(dim=2) ----
    # Feature f = key * M_SOFT + press, so each softmax group is a contiguous
    # run of M_SOFT lanes.  Stabilize with a single per-row global max (valid
    # since the max is an upper bound for every group; would only lose
    # precision/underflow if a group's logits sat ~88 below the row max,
    # which this bounded net never produces).
    rmax = jnp.max(logits, axis=-1, keepdims=True)      # one XLU reduction
    e = jnp.exp(logits - rmax)                           # EUP

    # Group sums on the idle MXU: (e @ S)[:, j] = sum of e over j's group.
    gsum = jnp.dot(e, s_ref[...], preferred_element_type=jnp.float32)

    inv = pl.reciprocal(gsum, approx=True)               # EUP, off the VPU
    out_ref[...] = e * inv


def init_params(key):
    """Deterministic init mimicking nn.Linear default U[-1/sqrt(fan_in), +]
    plus BatchNorm1d affine parameters and running statistics."""
    keys = jax.random.split(key, 10)

    def linear(kw, kb, fan_in, fan_out):
        bound = 1.0 / (fan_in ** 0.5)
        w = jax.random.uniform(kw, (fan_in, fan_out), jnp.float32, -bound, bound)
        b = jax.random.uniform(kb, (1, fan_out), jnp.float32, -bound, bound)
        return w, b

    w1, b1 = linear(keys[0], keys[1], z_size, g_dim)
    w2, b2 = linear(keys[2], keys[3], g_dim, 2 * g_dim)
    w3, b3 = linear(keys[4], keys[5], 2 * g_dim, OUT_FEATURES)
    # Non-trivial BN parameters so the BN path is actually exercised.
    gamma = 1.0 + 0.1 * jax.random.normal(keys[6], (1, 2 * g_dim), jnp.float32)
    beta = 0.1 * jax.random.normal(keys[7], (1, 2 * g_dim), jnp.float32)
    rmean = 0.1 * jax.random.normal(keys[8], (1, 2 * g_dim), jnp.float32)
    rvar = 1.0 + 0.1 * jax.random.uniform(keys[9], (1, 2 * g_dim), jnp.float32)
    return dict(w1=w1, b1=b1, w2=w2, b2=b2, w3=w3, b3=b3,
                gamma=gamma, beta=beta, rmean=rmean, rvar=rvar)


def _prep_kernel_params(params):
    """Pad W1 to 128 input rows, pad W3/b3 to 128 output columns, cast weights
    to bf16, and fold eval-BN (+ b2) into W2/shift2."""
    # Layer 1: zero-pad latent dim 100 -> 128.
    w1 = jnp.zeros((Z_PAD, g_dim), jnp.float32).at[:z_size].set(params["w1"])
    w1 = w1.astype(jnp.bfloat16)

    # Layer 2: fold eval-BN scale into the weights, and b2 into the shift.
    bn_scale = params["gamma"] / jnp.sqrt(params["rvar"] + BN_EPS)      # (1, 512)
    bn_shift = params["beta"] - params["rmean"] * bn_scale
    w2 = (params["w2"] * bn_scale).astype(jnp.bfloat16)                 # per-column
    shift2 = params["b2"] * bn_scale + bn_shift                         # (1, 512) f32

    # Layer 3: zero-pad output 64 -> 128 lanes (dummy groups -> uniform softmax,
    # sliced away in the wrapper).
    w3 = jnp.zeros((2 * g_dim, OUT_PAD), jnp.float32).at[:, :OUT_FEATURES].set(
        params["w3"]).astype(jnp.bfloat16)
    b3 = jnp.zeros((1, OUT_PAD), jnp.float32).at[:, :OUT_FEATURES].set(params["b3"])

    # Block-diagonal ones matrix for group sums (16 groups of 8 lanes).
    grp = jnp.arange(OUT_PAD) // M_SOFT
    s_mat = (grp[:, None] == grp[None, :]).astype(jnp.float32)          # (128, 128)

    return w1, params["b1"], w2, shift2, w3, b3, s_mat


@functools.partial(jax.jit, static_argnames=("tb",))
def generator_forward(z, params, *, tb=1024):
    """z: (B, z_size) latent -> (B, keys_size, MAX_KEYPRESSES+1) probabilities."""
    B = z.shape[0]
    w1, b1, w2, shift2, w3, b3, s_mat = _prep_kernel_params(params)

    # Batch tile: sublane multiple, large (per-grid-step overhead dominates the
    # tiny matmuls on single-TC chips), but capped at ~half the batch so large
    # batches split into >=2 parallel grid steps and both v7x TensorCores work.
    # VMEM use (weights ~0.5 MiB + a few MiB of f32 activations at tb=1024) is
    # far below every generation's scoped default; no vmem_limit needed.
    half = _round_up(max(1, (B + 1) // 2), 8)
    tb_eff = max(8, min(tb, half))
    b_pad = _round_up(B, tb_eff)

    z_pad = jnp.zeros((b_pad, Z_PAD), jnp.bfloat16)
    z_pad = z_pad.at[:B, :z_size].set(z.astype(jnp.bfloat16))

    def resident(shape):
        # Constant index_map -> DMA'd once, stays VMEM-resident across steps.
        return pl.BlockSpec(shape, lambda i: (0, 0))

    out = pl.pallas_call(
        generator_kernel,
        out_shape=jax.ShapeDtypeStruct((b_pad, OUT_PAD), jnp.float32),
        grid=(b_pad // tb_eff,),
        in_specs=[
            pl.BlockSpec((tb_eff, Z_PAD), lambda i: (i, 0)),           # x (batch-tiled)
            resident((Z_PAD, g_dim)), resident((1, g_dim)),            # W1, b1
            resident((g_dim, 2 * g_dim)), resident((1, 2 * g_dim)),    # W2', shift2
            resident((2 * g_dim, OUT_PAD)), resident((1, OUT_PAD)),    # W3, b3
            resident((OUT_PAD, OUT_PAD)),                              # S (group sums)
        ],
        out_specs=pl.BlockSpec((tb_eff, OUT_PAD), lambda i: (i, 0)),
        compiler_params=pltpu.CompilerParams(
            dimension_semantics=("parallel",)),
    )(z_pad, w1, b1, w2, shift2, w3, b3, s_mat)

    return out[:B, :OUT_FEATURES].reshape(B, keys_size, M_SOFT)


def generator_ref(z, params):
    """Pure-JAX reference mirroring the kernel numerics (bf16 weights/inputs
    into the MXU, f32 accumulation, folded eval-BN, per-row max softmax)."""
    w1, b1, w2, shift2, w3, b3, _ = _prep_kernel_params(params)
    B = z.shape[0]
    x = jnp.zeros((B, Z_PAD), jnp.bfloat16).at[:, :z_size].set(
        z.astype(jnp.bfloat16))
    h = jnp.dot(x, w1, preferred_element_type=jnp.float32) + b1
    h = jnp.maximum(h, NEG_SLOPE * h)
    h = jnp.dot(h.astype(jnp.bfloat16), w2,
                preferred_element_type=jnp.float32) + shift2
    h = jnp.maximum(h, NEG_SLOPE * h)
    logits = jnp.dot(h.astype(jnp.bfloat16), w3,
                     preferred_element_type=jnp.float32) + b3
    logits = logits[:, :OUT_FEATURES].reshape(B, keys_size, M_SOFT)
    rmax = jnp.max(logits.reshape(B, -1), axis=-1, keepdims=True)[..., None]
    e = jnp.exp(logits - rmax)
    return e / jnp.sum(e, axis=-1, keepdims=True)


if __name__ == "__main__":
    key = jax.random.PRNGKey(0)
    pkey, zkey = jax.random.split(key)

    params = init_params(pkey)

    # Generator.generate(): z ~ U(-1, 1), shape (batch, z_size).
    batch_size = 2
    z = jax.random.uniform(zkey, (batch_size, z_size), jnp.float32, -1.0, 1.0)

    out = jax.block_until_ready(generator_forward(z, params))
    ref = generator_ref(z, params)

    assert out.shape == (batch_size, keys_size, MAX_KEYPRESSES + 1), out.shape
    # approx reciprocal on the EUP -> slightly looser sum-to-one tolerance.
    assert bool(jnp.allclose(jnp.sum(out, axis=-1), 1.0, atol=1e-2))
    assert bool(jnp.allclose(out, ref, atol=5e-3, rtol=5e-3)), (
        float(jnp.max(jnp.abs(out - ref))))

    # TODO(synk): BatchNorm1d training-mode (batch statistics + running-stat
    # updates) is not implemented; the kernel reproduces eval/inference mode.
    print("KERNEL_OK")
</pallas_src>

<mosaic_0001>
module attributes {stable_mosaic.version = 11 : i64} {
  func.func @generator_kernel(%arg0: i32, %arg1: memref<8x128xbf16, #tpu.memory_space<vmem>>, %arg2: memref<128x256xbf16, #tpu.memory_space<vmem>>, %arg3: memref<1x256xf32, #tpu.memory_space<vmem>>, %arg4: memref<256x512xbf16, #tpu.memory_space<vmem>>, %arg5: memref<1x512xf32, #tpu.memory_space<vmem>>, %arg6: memref<512x128xbf16, #tpu.memory_space<vmem>>, %arg7: memref<1x128xf32, #tpu.memory_space<vmem>>, %arg8: memref<128x128xf32, #tpu.memory_space<vmem>>, %arg9: memref<8x128xf32, #tpu.memory_space<vmem>>) attributes {dimension_semantics = [#tpu.dimension_semantics<parallel>], iteration_bounds = array<i64: 1>, scalar_prefetch = 0 : i64, scratch_operands = 0 : i64, tpu.core_type = #tpu.core_type<tc>, window_params = [{transform_indices = @transform_0, window_bounds = array<i64: 8, 128>}, {pipeline_mode = #tpu.pipeline_mode<synchronous>, transform_indices = @transform_1, window_bounds = array<i64: 128, 256>}, {pipeline_mode = #tpu.pipeline_mode<synchronous>, transform_indices = @transform_2, window_bounds = array<i64: 1, 256>}, {pipeline_mode = #tpu.pipeline_mode<synchronous>, transform_indices = @transform_3, window_bounds = array<i64: 256, 512>}, {pipeline_mode = #tpu.pipeline_mode<synchronous>, transform_indices = @transform_4, window_bounds = array<i64: 1, 512>}, {pipeline_mode = #tpu.pipeline_mode<synchronous>, transform_indices = @transform_5, window_bounds = array<i64: 512, 128>}, {pipeline_mode = #tpu.pipeline_mode<synchronous>, transform_indices = @transform_6, window_bounds = array<i64: 1, 128>}, {pipeline_mode = #tpu.pipeline_mode<synchronous>, transform_indices = @transform_7, window_bounds = array<i64: 128, 128>}, {transform_indices = @transform_8, window_bounds = array<i64: 8, 128>}]} {
    %c0 = arith.constant 0 : index
    %c0_0 = arith.constant 0 : index
    %0 = vector.load %arg1[%c0, %c0_0] : memref<8x128xbf16, #tpu.memory_space<vmem>>, vector<8x128xbf16>
    %c0_1 = arith.constant 0 : index
    %c0_2 = arith.constant 0 : index
    %1 = vector.load %arg2[%c0_1, %c0_2] : memref<128x256xbf16, #tpu.memory_space<vmem>>, vector<128x256xbf16>
    %cst = arith.constant dense<0.000000e+00> : vector<8x256xf32>
    %2 = tpu.matmul %0, %1, %cst {dimension_numbers = #tpu.dot_dimension_numbers<[1], [0], [0], [1], [0, 0, 1, 1], [], []>} : vector<8x128xbf16>, vector<128x256xbf16>, vector<8x256xf32> -> vector<8x256xf32>
    %c0_3 = arith.constant 0 : index
    %c0_4 = arith.constant 0 : index
    %3 = vector.load %arg3[%c0_3, %c0_4] : memref<1x256xf32, #tpu.memory_space<vmem>>, vector<1x256xf32>
    %4 = vector.broadcast %3 : vector<1x256xf32> to vector<8x256xf32>
    %5 = arith.addf %2, %4 : vector<8x256xf32>
    %cst_5 = arith.constant 2.000000e-01 : f32
    %6 = vector.broadcast %cst_5 : f32 to vector<8x256xf32>
    %7 = arith.mulf %6, %5 : vector<8x256xf32>
    %8 = arith.maximumf %5, %7 : vector<8x256xf32>
    %9 = arith.truncf %8 : vector<8x256xf32> to vector<8x256xbf16>
    %c0_6 = arith.constant 0 : index
    %c0_7 = arith.constant 0 : index
    %10 = vector.load %arg4[%c0_6, %c0_7] : memref<256x512xbf16, #tpu.memory_space<vmem>>, vector<256x512xbf16>
    %cst_8 = arith.constant dense<0.000000e+00> : vector<8x512xf32>
    %11 = tpu.matmul %9, %10, %cst_8 {dimension_numbers = #tpu.dot_dimension_numbers<[1], [0], [0], [1], [0, 0, 1, 1], [], []>} : vector<8x256xbf16>, vector<256x512xbf16>, vector<8x512xf32> -> vector<8x512xf32>
    %c0_9 = arith.constant 0 : index
    %c0_10 = arith.constant 0 : index
    %12 = vector.load %arg5[%c0_9, %c0_10] : memref<1x512xf32, #tpu.memory_space<vmem>>, vector<1x512xf32>
    %13 = vector.broadcast %12 : vector<1x512xf32> to vector<8x512xf32>
    %14 = arith.addf %11, %13 : vector<8x512xf32>
    %cst_11 = arith.constant 2.000000e-01 : f32
    %15 = vector.broadcast %cst_11 : f32 to vector<8x512xf32>
    %16 = arith.mulf %15, %14 : vector<8x512xf32>
    %17 = arith.maximumf %14, %16 : vector<8x512xf32>
    %18 = arith.truncf %17 : vector<8x512xf32> to vector<8x512xbf16>
    %c0_12 = arith.constant 0 : index
    %c0_13 = arith.constant 0 : index
    %19 = vector.load %arg6[%c0_12, %c0_13] : memref<512x128xbf16, #tpu.memory_space<vmem>>, vector<512x128xbf16>
    %cst_14 = arith.constant dense<0.000000e+00> : vector<8x128xf32>
    %20 = tpu.matmul %18, %19, %cst_14 {dimension_numbers = #tpu.dot_dimension_numbers<[1], [0], [0], [1], [0, 0, 1, 1], [], []>} : vector<8x512xbf16>, vector<512x128xbf16>, vector<8x128xf32> -> vector<8x128xf32>
    %c0_15 = arith.constant 0 : index
    %c0_16 = arith.constant 0 : index
    %21 = vector.load %arg7[%c0_15, %c0_16] : memref<1x128xf32, #tpu.memory_space<vmem>>, vector<1x128xf32>
    %22 = vector.broadcast %21 : vector<1x128xf32> to vector<8x128xf32>
    %23 = arith.addf %20, %22 : vector<8x128xf32>
    %cst_17 = arith.constant dense<0xFF800000> : vector<8xf32>
    %24 = vector.multi_reduction <maximumf>, %23, %cst_17 [1] : vector<8x128xf32> to vector<8xf32>
    %25 = vector.shape_cast %24 : vector<8xf32> to vector<8x1xf32>
    %26 = vector.broadcast %25 : vector<8x1xf32> to vector<8x128xf32>
    %27 = arith.subf %23, %26 : vector<8x128xf32>
    %28 = math.exp %27 : vector<8x128xf32>
    %c0_18 = arith.constant 0 : index
    %c0_19 = arith.constant 0 : index
    %29 = vector.load %arg8[%c0_18, %c0_19] : memref<128x128xf32, #tpu.memory_space<vmem>>, vector<128x128xf32>
    %cst_20 = arith.constant dense<0.000000e+00> : vector<8x128xf32>
    %30 = tpu.matmul %28, %29, %cst_20 {dimension_numbers = #tpu.dot_dimension_numbers<[1], [0], [0], [1], [0, 0, 1, 1], [], []>} : vector<8x128xf32>, vector<128x128xf32>, vector<8x128xf32> -> vector<8x128xf32>
    %31 = tpu.reciprocal %30 {approx = true} : vector<8x128xf32> -> vector<8x128xf32>
    %32 = arith.mulf %28, %31 : vector<8x128xf32>
    %c0_21 = arith.constant 0 : index
    %c0_22 = arith.constant 0 : index
    %33 = vector.load %arg9[%c0_21, %c0_22] : memref<8x128xf32, #tpu.memory_space<vmem>>, vector<8x128xf32>
    tpu.vector_store %arg9[%c0_21, %c0_22], %32 {strides = array<i32>} : memref<8x128xf32, #tpu.memory_space<vmem>>, vector<8x128xf32>,
    return
  }
  func.func @transform_0(%arg0: i32) -> (i32, i32) {
    %c0_i32 = arith.constant 0 : i32
    %c0_i32_0 = arith.constant 0 : i32
    return %arg0, %c0_i32 : i32, i32
  }
  func.func @transform_1(%arg0: i32) -> (i32, i32) {
    %c0_i32 = arith.constant 0 : i32
    %c0_i32_0 = arith.constant 0 : i32
    %c0_i32_1 = arith.constant 0 : i32
    return %c0_i32, %c0_i32_0 : i32, i32
  }
  func.func @transform_2(%arg0: i32) -> (i32, i32) {
    %c0_i32 = arith.constant 0 : i32
    %c0_i32_0 = arith.constant 0 : i32
    %c0_i32_1 = arith.constant 0 : i32
    return %c0_i32, %c0_i32_0 : i32, i32
  }
  func.func @transform_3(%arg0: i32) -> (i32, i32) {
    %c0_i32 = arith.constant 0 : i32
    %c0_i32_0 = arith.constant 0 : i32
    %c0_i32_1 = arith.constant 0 : i32
    return %c0_i32, %c0_i32_0 : i32, i32
  }
  func.func @transform_4(%arg0: i32) -> (i32, i32) {
    %c0_i32 = arith.constant 0 : i32
    %c0_i32_0 = arith.constant 0 : i32
    %c0_i32_1 = arith.constant 0 : i32
    return %c0_i32, %c0_i32_0 : i32, i32
  }
  func.func @transform_5(%arg0: i32) -> (i32, i32) {
    %c0_i32 = arith.constant 0 : i32
    %c0_i32_0 = arith.constant 0 : i32
    %c0_i32_1 = arith.constant 0 : i32
    return %c0_i32, %c0_i32_0 : i32, i32
  }
  func.func @transform_6(%arg0: i32) -> (i32, i32) {
    %c0_i32 = arith.constant 0 : i32
    %c0_i32_0 = arith.constant 0 : i32
    %c0_i32_1 = arith.constant 0 : i32
    return %c0_i32, %c0_i32_0 : i32, i32
  }
  func.func @transform_7(%arg0: i32) -> (i32, i32) {
    %c0_i32 = arith.constant 0 : i32
    %c0_i32_0 = arith.constant 0 : i32
    %c0_i32_1 = arith.constant 0 : i32
    return %c0_i32, %c0_i32_0 : i32, i32
  }
  func.func @transform_8(%arg0: i32) -> (i32, i32) {
    %c0_i32 = arith.constant 0 : i32
    %c0_i32_0 = arith.constant 0 : i32
    return %arg0, %c0_i32 : i32, i32
  }
}

</mosaic_0001>

<llo_original>
// kernel: generator_forward.1
$region0: #{generator_forward.1}
  #allocation0 [shape = 'u32[]', space=smem, size = 0x4, offset = 0x4, fixed_abs, tag = 'smem constant byte address 0x4 - core index']
  #allocation1 [shape = 'u32[144,128]{1,0:T(1,128)}', space=vmem, size = 0x12000, scoped, tag = 'internal scratch']
  %s0 = inlined_call_operand.vmem [shape: bf16[8,128], index: 0, kind: input, shape index: {}]
  %s1 = inlined_call_operand.vmem [shape: bf16[128,256], index: 1, kind: input, shape index: {}]
  %s2 = inlined_call_operand.vmem [shape: f32[1,256], index: 2, kind: input, shape index: {}]
  %s3 = inlined_call_operand.vmem [shape: bf16[256,512], index: 3, kind: input, shape index: {}]
  %s4 = inlined_call_operand.vmem [shape: f32[1,512], index: 4, kind: input, shape index: {}]
  %s5 = inlined_call_operand.vmem [shape: bf16[512,128], index: 5, kind: input, shape index: {}]
  %s6 = inlined_call_operand.vmem [shape: f32[1,128], index: 6, kind: input, shape index: {}]
  %s7 = inlined_call_operand.vmem [shape: f32[128,128], index: 7, kind: input, shape index: {}]
  %s8 = inlined_call_operand.vmem [shape: f32[8,128], index: 8, kind: output, shape index: {}]
  %s9 = sld [smem:[#allocation0]]
  $region42: #{generator_forward.1} parent=0
    _
  %s11 = ssub.s32 1, %s9
  %s12 = scalar_select 0, %s11, %s9
  // Predicated region
  $region2: #{generator_forward.1} parent=0 // pred_check
    _
  $region3: #{generator_forward.1} parent=0 // pred_check_branch
    %14 = sbr.rel (0) target = $region5
  $region4: #{generator_forward.1} parent=0 // pred_region
    _
  $region5: #{generator_forward.1} parent=0 // pred_fallthru
    _
  // Predicated region
  $region6: #{generator_forward.1} parent=0 // pred_check
    _
  $region7: #{generator_forward.1} parent=0 // pred_check_branch
    %16 = sbr.rel (0) target = $region9
  $region8: #{generator_forward.1} parent=0 // pred_region
    _
  $region9: #{generator_forward.1} parent=0 // pred_fallthru
    _
  // Predicated region
  $region10: #{generator_forward.1} parent=0 // pred_check
    _
  $region11: #{generator_forward.1} parent=0 // pred_check_branch
    %18 = sbr.rel (0) target = $region13
  $region12: #{generator_forward.1} parent=0 // pred_region
    _
  $region13: #{generator_forward.1} parent=0 // pred_fallthru
    _
  // Predicated region
  $region14: #{generator_forward.1} parent=0 // pred_check
    _
  $region15: #{generator_forward.1} parent=0 // pred_check_branch
    %20 = sbr.rel (0) target = $region17
  $region16: #{generator_forward.1} parent=0 // pred_region
    _
  $region17: #{generator_forward.1} parent=0 // pred_fallthru
    _
  // Predicated region
  $region18: #{generator_forward.1} parent=0 // pred_check
    _
  $region19: #{generator_forward.1} parent=0 // pred_check_branch
    %22 = sbr.rel (0) target = $region21
  $region20: #{generator_forward.1} parent=0 // pred_region
    _
  $region21: #{generator_forward.1} parent=0 // pred_fallthru
    _
  // Predicated region
  $region22: #{generator_forward.1} parent=0 // pred_check
    _
  $region23: #{generator_forward.1} parent=0 // pred_check_branch
    %24 = sbr.rel (0) target = $region25
  $region24: #{generator_forward.1} parent=0 // pred_region
    _
  $region25: #{generator_forward.1} parent=0 // pred_fallthru
    _
  // Predicated region
  $region26: #{generator_forward.1} parent=0 // pred_check
    _
  $region27: #{generator_forward.1} parent=0 // pred_check_branch
    %26 = sbr.rel (0) target = $region29
  $region28: #{generator_forward.1} parent=0 // pred_region
    _
  $region29: #{generator_forward.1} parent=0 // pred_fallthru
    _
  // Predicated region
  $region30: #{generator_forward.1} parent=0 // pred_check
    _
  $region31: #{generator_forward.1} parent=0 // pred_check_branch
    %28 = sbr.rel (0) target = $region33
  $region32: #{generator_forward.1} parent=0 // pred_region
    _
  $region33: #{generator_forward.1} parent=0 // pred_fallthru
    _
  %v30 = vld [vmem:[%s0] sm:$0xf]
  %v31 = vld [vmem:[%s1] sm:$0xff]
  %v32 = vld [vmem:[%s1 + $0x8] sm:$0xff]
  %v33 = vld [vmem:[%s1 + $0x10] sm:$0xff]
  %v34 = vld [vmem:[%s1 + $0x18] sm:$0xff]
  %v35 = vld [vmem:[%s1 + $0x20] sm:$0xff]
  %v36 = vld [vmem:[%s1 + $0x28] sm:$0xff]
  %v37 = vld [vmem:[%s1 + $0x30] sm:$0xff]
  %v38 = vld [vmem:[%s1 + $0x38] sm:$0xff]
  %v39 = vld [vmem:[%s1 + $0x40] sm:$0xff]
  %v40 = vld [vmem:[%s1 + $0x48] sm:$0xff]
  %v41 = vld [vmem:[%s1 + $0x50] sm:$0xff]
  %v42 = vld [vmem:[%s1 + $0x58] sm:$0xff]
  %v43 = vld [vmem:[%s1 + $0x60] sm:$0xff]
  %v44 = vld [vmem:[%s1 + $0x68] sm:$0xff]
  %v45 = vld [vmem:[%s1 + $0x70] sm:$0xff]
  %v46 = vld [vmem:[%s1 + $0x78] sm:$0xff]
  %v47 = vld [vmem:[%s2] sm:$0x3]
  %v49 = vlaneseq
  %v50 = vshrl.u32 %v49, 7
  %v51 = vsub.s32 0, %v50
  %v52 = vrot.slane %v47, %v51
  %v53 = vlaneseq
  %v54 = vshrl.u32 %v53, 7
  %v55 = vsub.s32 1, %v54
  %v56 = vrot.slane %v47, %v55
  %v75 = vunpack.c.l.b16 %v31
  %v76 = vunpack.c.h.b16 %v31
  %v77 = vunpack.c.l.b16 %v32
  %v78 = vunpack.c.h.b16 %v32
  %v79 = vunpack.c.l.b16 %v33
  %v80 = vunpack.c.h.b16 %v33
  %v81 = vunpack.c.l.b16 %v34
  %v82 = vunpack.c.h.b16 %v34
  %v83 = vunpack.c.l.b16 %v35
  %v84 = vunpack.c.h.b16 %v35
  %v85 = vunpack.c.l.b16 %v36
  %v86 = vunpack.c.h.b16 %v36
  %v87 = vunpack.c.l.b16 %v37
  %v88 = vunpack.c.h.b16 %v37
  %v89 = vunpack.c.l.b16 %v38
  %v90 = vunpack.c.h.b16 %v38
  %v91 = vunpack.c.l.b16 %v39
  %v92 = vunpack.c.h.b16 %v39
  %v93 = vunpack.c.l.b16 %v40
  %v94 = vunpack.c.h.b16 %v40
  %v95 = vunpack.c.l.b16 %v41
  %v96 = vunpack.c.h.b16 %v41
  %v97 = vunpack.c.l.b16 %v42
  %v98 = vunpack.c.h.b16 %v42
  %v99 = vunpack.c.l.b16 %v43
  %v100 = vunpack.c.h.b16 %v43
  %v101 = vunpack.c.l.b16 %v44
  %v102 = vunpack.c.h.b16 %v44
  %v103 = vunpack.c.l.b16 %v45
  %v104 = vunpack.c.h.b16 %v45
  %v105 = vunpack.c.l.b16 %v46
  %v106 = vunpack.c.h.b16 %v46
  %v107 = vpack.c.b16 %v77, %v75
  %v108 = vpack.c.b16 %v78, %v76
  %v109 = vpack.c.b16 %v81, %v79
  %v110 = vpack.c.b16 %v82, %v80
  %v111 = vpack.c.b16 %v85, %v83
  %v112 = vpack.c.b16 %v86, %v84
  %v113 = vpack.c.b16 %v89, %v87
  %v114 = vpack.c.b16 %v90, %v88
  %v115 = vpack.c.b16 %v93, %v91
  %v116 = vpack.c.b16 %v94, %v92
  %v117 = vpack.c.b16 %v97, %v95
  %v118 = vpack.c.b16 %v98, %v96
  %v119 = vpack.c.b16 %v101, %v99
  %v120 = vpack.c.b16 %v102, %v100
  %v121 = vpack.c.b16 %v105, %v103
  %v122 = vpack.c.b16 %v106, %v104
  %139 = vmatprep.subr.bf16.mxu0 %v122
  %140 = vmatpush1.bf16.msra.mxu0 %v121
  %141 = vmatprep.subr.bf16.mxu0 %v120
  %142 = vmatpush1.bf16.msra.mxu0 %v119
  %143 = vmatprep.subr.bf16.mxu0 %v118
  %144 = vmatpush1.bf16.msra.mxu0 %v117
  %145 = vmatprep.subr.bf16.mxu0 %v116
  %146 = vmatpush1.bf16.msra.mxu0 %v115
  %147 = vmatprep.subr.bf16.mxu0 %v114
  %148 = vmatpush1.bf16.msra.mxu0 %v113
  %149 = vmatprep.subr.bf16.mxu0 %v112
  %150 = vmatpush1.bf16.msra.mxu0 %v111
  %151 = vmatprep.subr.bf16.mxu0 %v110
  %152 = vmatpush1.bf16.msra.mxu0 %v109
  %153 = vmatprep.subr.bf16.mxu0 %v108
  %154 = vmatpush1.bf16.msra.mxu0 %v107
  %155 = vmatprep.subr.bf16.mxu0 0
  %156 = vmatpush2.bf16.msra.mxu0 0
  %157 = vmatprep.subr.bf16.mxu0 0
  %158 = vmatpush2.bf16.msra.mxu0 0
  %159 = vmatprep.subr.bf16.mxu0 0
  %160 = vmatpush2.bf16.msra.mxu0 0
  %161 = vmatprep.subr.bf16.mxu0 0
  %162 = vmatpush2.bf16.msra.mxu0 0
  %163 = vmatprep.subr.bf16.mxu0 0
  %164 = vmatpush2.bf16.msra.mxu0 0
  %165 = vmatprep.subr.bf16.mxu0 0
  %166 = vmatpush2.bf16.msra.mxu0 0
  %167 = vmatprep.subr.bf16.mxu0 0
  %168 = vmatpush2.bf16.msra.mxu0 0
  %169 = vmatprep.subr.bf16.mxu0 0
  %170 = vmatpush2.bf16.msra.mxu0 0
  %171 = vmatprep.mubr.bf16.mxu0 0
  %172 = vmatmul.mubr.bf16.gmra.mxu0 %v30
  %v173 = vpop.f32.mrf.mxu0
  %v174 = vadd.f32 %v52, %v173
  %v175 = vpop.f32.mrf.mxu0
  %v176 = vadd.f32 %v56, %v175
  %v177 = vpop.f32.mrf.mxu0
  %v178 = vpop.f32.mrf.mxu0
  %179 = vdwg.mxu0
  %v180 = vmul.f32 %v174, 0.2
  %v181 = vmul.f32 %v176, 0.2
  %v182 = vmax.f32 %v174, %v180
  %v183 = vmax.f32 %v176, %v181
  %v184 = vpack.c.bf16 %v182, %v182
  %v185 = vpack.c.bf16 %v183, %v183
  %v186 = vld [vmem:[%s3] sm:$0xff]
  %v187 = vld [vmem:[%s3 + $0x8] sm:$0xff]
  %v188 = vld [vmem:[%s3 + $0x10] sm:$0xff]
  %v189 = vld [vmem:[%s3 + $0x18] sm:$0xff]
  %v190 = vld [vmem:[%s3 + $0x20] sm:$0xff]
  %v191 = vld [vmem:[%s3 + $0x28] sm:$0xff]
  %v192 = vld [vmem:[%s3 + $0x30] sm:$0xff]
  %v193 = vld [vmem:[%s3 + $0x38] sm:$0xff]
  %v194 = vld [vmem:[%s3 + $0x40] sm:$0xff]
  %v195 = vld [vmem:[%s3 + $0x48] sm:$0xff]
  %v196 = vld [vmem:[%s3 + $0x50] sm:$0xff]
  %v197 = vld [vmem:[%s3 + $0x58] sm:$0xff]
  %v198 = vld [vmem:[%s3 + $0x60] sm:$0xff]
  %v199 = vld [vmem:[%s3 + $0x68] sm:$0xff]
  %v200 = vld [vmem:[%s3 + $0x70] sm:$0xff]
  %v201 = vld [vmem:[%s3 + $0x78] sm:$0xff]
  %v202 = vld [vmem:[%s3 + $0x80] sm:$0xff]
  %v203 = vld [vmem:[%s3 + $0x88] sm:$0xff]
  %v204 = vld [vmem:[%s3 + $0x90] sm:$0xff]
  %v205 = vld [vmem:[%s3 + $0x98] sm:$0xff]
  %v206 = vld [vmem:[%s3 + $0xa0] sm:$0xff]
  %v207 = vld [vmem:[%s3 + $0xa8] sm:$0xff]
  %v208 = vld [vmem:[%s3 + $0xb0] sm:$0xff]
  %v209 = vld [vmem:[%s3 + $0xb8] sm:$0xff]
  %v210 = vld [vmem:[%s3 + $0xc0] sm:$0xff]
  %v211 = vld [vmem:[%s3 + $0xc8] sm:$0xff]
  %v212 = vld [vmem:[%s3 + $0xd0] sm:$0xff]
  %v213 = vld [vmem:[%s3 + $0xd8] sm:$0xff]
  %v214 = vld [vmem:[%s3 + $0xe0] sm:$0xff]
  %v215 = vld [vmem:[%s3 + $0xe8] sm:$0xff]
  %v216 = vld [vmem:[%s3 + $0xf0] sm:$0xff]
  %v217 = vld [vmem:[%s3 + $0xf8] sm:$0xff]
  %v218 = vld [vmem:[%s3 + $0x100] sm:$0xff]
  %v219 = vld [vmem:[%s3 + $0x108] sm:$0xff]
  %v220 = vld [vmem:[%s3 + $0x110] sm:$0xff]
  %v221 = vld [vmem:[%s3 + $0x118] sm:$0xff]
  %v222 = vld [vmem:[%s3 + $0x120] sm:$0xff]
  %v223 = vld [vmem:[%s3 + $0x128] sm:$0xff]
  %v224 = vld [vmem:[%s3 + $0x130] sm:$0xff]
  %v225 = vld [vmem:[%s3 + $0x138] sm:$0xff]
  %v226 = vld [vmem:[%s3 + $0x140] sm:$0xff]
  %v227 = vld [vmem:[%s3 + $0x148] sm:$0xff]
  %v228 = vld [vmem:[%s3 + $0x150] sm:$0xff]
  %v229 = vld [vmem:[%s3 + $0x158] sm:$0xff]
  %v230 = vld [vmem:[%s3 + $0x160] sm:$0xff]
  %v231 = vld [vmem:[%s3 + $0x168] sm:$0xff]
  %v232 = vld [vmem:[%s3 + $0x170] sm:$0xff]
  %v233 = vld [vmem:[%s3 + $0x178] sm:$0xff]
  %v234 = vld [vmem:[%s3 + $0x180] sm:$0xff]
  %v235 = vld [vmem:[%s3 + $0x188] sm:$0xff]
  %v236 = vld [vmem:[%s3 + $0x190] sm:$0xff]
  %v237 = vld [vmem:[%s3 + $0x198] sm:$0xff]
  %v238 = vld [vmem:[%s3 + $0x1a0] sm:$0xff]
  %v239 = vld [vmem:[%s3 + $0x1a8] sm:$0xff]
  %v240 = vld [vmem:[%s3 + $0x1b0] sm:$0xff]
  %v241 = vld [vmem:[%s3 + $0x1b8] sm:$0xff]
  %v242 = vld [vmem:[%s3 + $0x1c0] sm:$0xff]
  %v243 = vld [vmem:[%s3 + $0x1c8] sm:$0xff]
  %v244 = vld [vmem:[%s3 + $0x1d0] sm:$0xff]
  %v245 = vld [vmem:[%s3 + $0x1d8] sm:$0xff]
  %v246 = vld [vmem:[%s3 + $0x1e0] sm:$0xff]
  %v247 = vld [vmem:[%s3 + $0x1e8] sm:$0xff]
  %v248 = vld [vmem:[%s3 + $0x1f0] sm:$0xff]
  %v249 = vld [vmem:[%s3 + $0x1f8] sm:$0xff]
  %v250 = vld [vmem:[%s4] sm:$0xf]
  %v252 = vlaneseq
  %v253 = vshrl.u32 %v252, 7
  %v254 = vsub.s32 0, %v253
  %v255 = vrot.slane %v250, %v254
  %v256 = vlaneseq
  %v257 = vshrl.u32 %v256, 7
  %v258 = vsub.s32 1, %v257
  %v259 = vrot.slane %v250, %v258
  %v260 = vlaneseq
  %v261 = vshrl.u32 %v260, 7
  %v262 = vsub.s32 2, %v261
  %v263 = vrot.slane %v250, %v262
  %v264 = vlaneseq
  %v265 = vshrl.u32 %v264, 7
  %v266 = vsub.s32 3, %v265
  %v267 = vrot.slane %v250, %v266
  %v336 = vunpack.c.l.b16 %v186
  %v337 = vunpack.c.h.b16 %v186
  %v338 = vunpack.c.l.b16 %v187
  %v339 = vunpack.c.h.b16 %v187
  %v340 = vunpack.c.l.b16 %v188
  %v341 = vunpack.c.h.b16 %v188
  %v342 = vunpack.c.l.b16 %v189
  %v343 = vunpack.c.h.b16 %v189
  %v344 = vunpack.c.l.b16 %v190
  %v345 = vunpack.c.h.b16 %v190
  %v346 = vunpack.c.l.b16 %v191
  %v347 = vunpack.c.h.b16 %v191
  %v348 = vunpack.c.l.b16 %v192
  %v349 = vunpack.c.h.b16 %v192
  %v350 = vunpack.c.l.b16 %v193
  %v351 = vunpack.c.h.b16 %v193
  %v352 = vunpack.c.l.b16 %v194
  %v353 = vunpack.c.h.b16 %v194
  %v354 = vunpack.c.l.b16 %v195
  %v355 = vunpack.c.h.b16 %v195
  %v356 = vunpack.c.l.b16 %v196
  %v357 = vunpack.c.h.b16 %v196
  %v358 = vunpack.c.l.b16 %v197
  %v359 = vunpack.c.h.b16 %v197
  %v360 = vunpack.c.l.b16 %v198
  %v361 = vunpack.c.h.b16 %v198
  %v362 = vunpack.c.l.b16 %v199
  %v363 = vunpack.c.h.b16 %v199
  %v364 = vunpack.c.l.b16 %v200
  %v365 = vunpack.c.h.b16 %v200
  %v366 = vunpack.c.l.b16 %v201
  %v367 = vunpack.c.h.b16 %v201
  %v368 = vunpack.c.l.b16 %v202
  %v369 = vunpack.c.h.b16 %v202
  %v370 = vunpack.c.l.b16 %v203
  %v371 = vunpack.c.h.b16 %v203
  %v372 = vunpack.c.l.b16 %v204
  %v373 = vunpack.c.h.b16 %v204
  %v374 = vunpack.c.l.b16 %v205
  %v375 = vunpack.c.h.b16 %v205
  %v376 = vunpack.c.l.b16 %v206
  %v377 = vunpack.c.h.b16 %v206
  %v378 = vunpack.c.l.b16 %v207
  %v379 = vunpack.c.h.b16 %v207
  %v380 = vunpack.c.l.b16 %v208
  %v381 = vunpack.c.h.b16 %v208
  %v382 = vunpack.c.l.b16 %v209
  %v383 = vunpack.c.h.b16 %v209
  %v384 = vunpack.c.l.b16 %v210
  %v385 = vunpack.c.h.b16 %v210
  %v386 = vunpack.c.l.b16 %v211
  %v387 = vunpack.c.h.b16 %v211
  %v388 = vunpack.c.l.b16 %v212
  %v389 = vunpack.c.h.b16 %v212
  %v390 = vunpack.c.l.b16 %v213
  %v391 = vunpack.c.h.b16 %v213
  %v392 = vunpack.c.l.b16 %v214
  %v393 = vunpack.c.h.b16 %v214
  %v394 = vunpack.c.l.b16 %v215
  %v395 = vunpack.c.h.b16 %v215
  %v396 = vunpack.c.l.b16 %v216
  %v397 = vunpack.c.h.b16 %v216
  %v398 = vunpack.c.l.b16 %v217
  %v399 = vunpack.c.h.b16 %v217
  %v400 = vunpack.c.l.b16 %v218
  %v401 = vunpack.c.h.b16 %v218
  %v402 = vunpack.c.l.b16 %v219
  %v403 = vunpack.c.h.b16 %v219
  %v404 = vunpack.c.l.b16 %v220
  %v405 = vunpack.c.h.b16 %v220
  %v406 = vunpack.c.l.b16 %v221
  %v407 = vunpack.c.h.b16 %v221
  %v408 = vunpack.c.l.b16 %v222
  %v409 = vunpack.c.h.b16 %v222
  %v410 = vunpack.c.l.b16 %v223
  %v411 = vunpack.c.h.b16 %v223
  %v412 = vunpack.c.l.b16 %v224
  %v413 = vunpack.c.h.b16 %v224
  %v414 = vunpack.c.l.b16 %v225
  %v415 = vunpack.c.h.b16 %v225
  %v416 = vunpack.c.l.b16 %v226
  %v417 = vunpack.c.h.b16 %v226
  %v418 = vunpack.c.l.b16 %v227
  %v419 = vunpack.c.h.b16 %v227
  %v420 = vunpack.c.l.b16 %v228
  %v421 = vunpack.c.h.b16 %v228
  %v422 = vunpack.c.l.b16 %v229
  %v423 = vunpack.c.h.b16 %v229
  %v424 = vunpack.c.l.b16 %v230
  %v425 = vunpack.c.h.b16 %v230
  %v426 = vunpack.c.l.b16 %v231
  %v427 = vunpack.c.h.b16 %v231
  %v428 = vunpack.c.l.b16 %v232
  %v429 = vunpack.c.h.b16 %v232
  %v430 = vunpack.c.l.b16 %v233
  %v431 = vunpack.c.h.b16 %v233
  %v432 = vunpack.c.l.b16 %v234
  %v433 = vunpack.c.h.b16 %v234
  %v434 = vunpack.c.l.b16 %v235
  %v435 = vunpack.c.h.b16 %v235
  %v436 = vunpack.c.l.b16 %v236
  %v437 = vunpack.c.h.b16 %v236
  %v438 = vunpack.c.l.b16 %v237
  %v439 = vunpack.c.h.b16 %v237
  %v440 = vunpack.c.l.b16 %v238
  %v441 = vunpack.c.h.b16 %v238
  %v442 = vunpack.c.l.b16 %v239
  %v443 = vunpack.c.h.b16 %v239
  %v444 = vunpack.c.l.b16 %v240
  %v445 = vunpack.c.h.b16 %v240
  %v446 = vunpack.c.l.b16 %v241
  %v447 = vunpack.c.h.b16 %v241
  %v448 = vunpack.c.l.b16 %v242
  %v449 = vunpack.c.h.b16 %v242
  %v450 = vunpack.c.l.b16 %v243
  %v451 = vunpack.c.h.b16 %v243
  %v452 = vunpack.c.l.b16 %v244
  %v453 = vunpack.c.h.b16 %v244
  %v454 = vunpack.c.l.b16 %v245
  %v455 = vunpack.c.h.b16 %v245
  %v456 = vunpack.c.l.b16 %v246
  %v457 = vunpack.c.h.b16 %v246
  %v458 = vunpack.c.l.b16 %v247
  %v459 = vunpack.c.h.b16 %v247
  %v460 = vunpack.c.l.b16 %v248
  %v461 = vunpack.c.h.b16 %v248
  %v462 = vunpack.c.l.b16 %v249
  %v463 = vunpack.c.h.b16 %v249
  %v464 = vpack.c.b16 %v340, %v336
  %v465 = vpack.c.b16 %v341, %v337
  %v466 = vpack.c.b16 %v342, %v338
  %v467 = vpack.c.b16 %v343, %v339
  %v468 = vpack.c.b16 %v348, %v344
  %v469 = vpack.c.b16 %v349, %v345
  %v470 = vpack.c.b16 %v350, %v346
  %v471 = vpack.c.b16 %v351, %v347
  %v472 = vpack.c.b16 %v356, %v352
  %v473 = vpack.c.b16 %v357, %v353
  %v474 = vpack.c.b16 %v358, %v354
  %v475 = vpack.c.b16 %v359, %v355
  %v476 = vpack.c.b16 %v364, %v360
  %v477 = vpack.c.b16 %v365, %v361
  %v478 = vpack.c.b16 %v366, %v362
  %v479 = vpack.c.b16 %v367, %v363
  %v480 = vpack.c.b16 %v372, %v368
  %v481 = vpack.c.b16 %v373, %v369
  %v482 = vpack.c.b16 %v374, %v370
  %v483 = vpack.c.b16 %v375, %v371
  %v484 = vpack.c.b16 %v380, %v376
  %v485 = vpack.c.b16 %v381, %v377
  %v486 = vpack.c.b16 %v382, %v378
  %v487 = vpack.c.b16 %v383, %v379
  %v488 = vpack.c.b16 %v388, %v384
  %v489 = vpack.c.b16 %v389, %v385
  %v490 = vpack.c.b16 %v390, %v386
  %v491 = vpack.c.b16 %v391, %v387
  %v492 = vpack.c.b16 %v396, %v392
  %v493 = vpack.c.b16 %v397, %v393
  %v494 = vpack.c.b16 %v398, %v394
  %v495 = vpack.c.b16 %v399, %v395
  %v496 = vpack.c.b16 %v404, %v400
  %v497 = vpack.c.b16 %v405, %v401
  %v498 = vpack.c.b16 %v406, %v402
  %v499 = vpack.c.b16 %v407, %v403
  %v500 = vpack.c.b16 %v412, %v408
  %v501 = vpack.c.b16 %v413, %v409
  %v502 = vpack.c.b16 %v414, %v410
  %v503 = vpack.c.b16 %v415, %v411
  %v504 = vpack.c.b16 %v420, %v416
  %v505 = vpack.c.b16 %v421, %v417
  %v506 = vpack.c.b16 %v422, %v418
  %v507 = vpack.c.b16 %v423, %v419
  %v508 = vpack.c.b16 %v428, %v424
  %v509 = vpack.c.b16 %v429, %v425
  %v510 = vpack.c.b16 %v430, %v426
  %v511 = vpack.c.b16 %v431, %v427
  %v512 = vpack.c.b16 %v436, %v432
  %v513 = vpack.c.b16 %v437, %v433
  %v514 = vpack.c.b16 %v438, %v434
  %v515 = vpack.c.b16 %v439, %v435
  %v516 = vpack.c.b16 %v444, %v440
  %v517 = vpack.c.b16 %v445, %v441
  %v518 = vpack.c.b16 %v446, %v442
  %v519 = vpack.c.b16 %v447, %v443
  %v520 = vpack.c.b16 %v452, %v448
  %v521 = vpack.c.b16 %v453, %v449
  %v522 = vpack.c.b16 %v454, %v450
  %v523 = vpack.c.b16 %v455, %v451
  %v524 = vpack.c.b16 %v460, %v456
  %v525 = vpack.c.b16 %v461, %v457
  %v526 = vpack.c.b16 %v462, %v458
  %v527 = vpack.c.b16 %v463, %v459
  %592 = vmatprep.subr.bf16.mxu0 %v493
  %593 = vmatpush1.bf16.msra.mxu0 %v492
  %594 = vmatprep.subr.bf16.mxu0 %v489
  %595 = vmatpush1.bf16.msra.mxu0 %v488
  %596 = vmatprep.subr.bf16.mxu0 %v485
  %597 = vmatpush1.bf16.msra.mxu0 %v484
  %598 = vmatprep.subr.bf16.mxu0 %v481
  %599 = vmatpush1.bf16.msra.mxu0 %v480
  %600 = vmatprep.subr.bf16.mxu0 %v477
  %601 = vmatpush1.bf16.msra.mxu0 %v476
  %602 = vmatprep.subr.bf16.mxu0 %v473
  %603 = vmatpush1.bf16.msra.mxu0 %v472
  %604 = vmatprep.subr.bf16.mxu0 %v469
  %605 = vmatpush1.bf16.msra.mxu0 %v468
  %606 = vmatprep.subr.bf16.mxu0 %v465
  %607 = vmatpush1.bf16.msra.mxu0 %v464
  %608 = vmatprep.subr.bf16.mxu0 %v525
  %609 = vmatpush2.bf16.msra.mxu0 %v524
  %610 = vmatprep.subr.bf16.mxu0 %v521
  %611 = vmatpush2.bf16.msra.mxu0 %v520
  %612 = vmatprep.subr.bf16.mxu0 %v517
  %613 = vmatpush2.bf16.msra.mxu0 %v516
  %614 = vmatprep.subr.bf16.mxu0 %v513
  %615 = vmatpush2.bf16.msra.mxu0 %v512
  %616 = vmatprep.subr.bf16.mxu0 %v509
  %617 = vmatpush2.bf16.msra.mxu0 %v508
  %618 = vmatprep.subr.bf16.mxu0 %v505
  %619 = vmatpush2.bf16.msra.mxu0 %v504
  %620 = vmatprep.subr.bf16.mxu0 %v501
  %621 = vmatpush2.bf16.msra.mxu0 %v500
  %622 = vmatprep.subr.bf16.mxu0 %v497
  %623 = vmatpush2.bf16.msra.mxu0 %v496
  %624 = vmatprep.mubr.bf16.mxu0 %v185
  %625 = vmatmul.mubr.bf16.gmra.mxu0 %v184
  %v626 = vpop.f32.mrf.mxu0
  %v627 = vadd.f32 %v255, %v626
  %v628 = vpop.f32.mrf.mxu0
  %v629 = vadd.f32 %v259, %v628
  %v630 = vpop.f32.mrf.mxu0
  %v631 = vpop.f32.mrf.mxu0
  %632 = vdwg.mxu0
  %633 = vmatprep.subr.bf16.mxu0 %v495
  %634 = vmatpush1.bf16.msra.mxu0 %v494
  %635 = vmatprep.subr.bf16.mxu0 %v491
  %636 = vmatpush1.bf16.msra.mxu0 %v490
  %637 = vmatprep.subr.bf16.mxu0 %v487
  %638 = vmatpush1.bf16.msra.mxu0 %v486
  %639 = vmatprep.subr.bf16.mxu0 %v483
  %640 = vmatpush1.bf16.msra.mxu0 %v482
  %641 = vmatprep.subr.bf16.mxu0 %v479
  %642 = vmatpush1.bf16.msra.mxu0 %v478
  %643 = vmatprep.subr.bf16.mxu0 %v475
  %644 = vmatpush1.bf16.msra.mxu0 %v474
  %645 = vmatprep.subr.bf16.mxu0 %v471
  %646 = vmatpush1.bf16.msra.mxu0 %v470
  %647 = vmatprep.subr.bf16.mxu0 %v467
  %648 = vmatpush1.bf16.msra.mxu0 %v466
  %649 = vmatprep.subr.bf16.mxu0 %v527
  %650 = vmatpush2.bf16.msra.mxu0 %v526
  %651 = vmatprep.subr.bf16.mxu0 %v523
  %652 = vmatpush2.bf16.msra.mxu0 %v522
  %653 = vmatprep.subr.bf16.mxu0 %v519
  %654 = vmatpush2.bf16.msra.mxu0 %v518
  %655 = vmatprep.subr.bf16.mxu0 %v515
  %656 = vmatpush2.bf16.msra.mxu0 %v514
  %657 = vmatprep.subr.bf16.mxu0 %v511
  %658 = vmatpush2.bf16.msra.mxu0 %v510
  %659 = vmatprep.subr.bf16.mxu0 %v507
  %660 = vmatpush2.bf16.msra.mxu0 %v506
  %661 = vmatprep.subr.bf16.mxu0 %v503
  %662 = vmatpush2.bf16.msra.mxu0 %v502
  %663 = vmatprep.subr.bf16.mxu0 %v499
  %664 = vmatpush2.bf16.msra.mxu0 %v498
  %665 = vmatprep.mubr.bf16.mxu0 %v185
  %666 = vmatmul.mubr.bf16.gmra.mxu0 %v184
  %v667 = vpop.f32.mrf.mxu0
  %v668 = vadd.f32 %v263, %v667
  %v669 = vpop.f32.mrf.mxu0
  %v670 = vadd.f32 %v267, %v669
  %v671 = vpop.f32.mrf.mxu0
  %v672 = vpop.f32.mrf.mxu0
  %673 = vdwg.mxu0
  %v674 = vmul.f32 %v627, 0.2
  %v675 = vmul.f32 %v629, 0.2
  %v676 = vmul.f32 %v668, 0.2
  %v677 = vmul.f32 %v670, 0.2
  %v678 = vmax.f32 %v627, %v674
  %v679 = vmax.f32 %v629, %v675
  %v680 = vmax.f32 %v668, %v676
  %v681 = vmax.f32 %v670, %v677
  %v682 = vpack.c.bf16 %v678, %v678
  %v683 = vpack.c.bf16 %v679, %v679
  %v684 = vpack.c.bf16 %v680, %v680
  %v685 = vpack.c.bf16 %v681, %v681
  %v686 = vld [vmem:[%s5] sm:$0xf]
  %v687 = vld [vmem:[%s5 + $0x4] sm:$0xf]
  %v688 = vld [vmem:[%s5 + $0x8] sm:$0xf]
  %v689 = vld [vmem:[%s5 + $0xc] sm:$0xf]
  %v690 = vld [vmem:[%s5 + $0x10] sm:$0xf]
  %v691 = vld [vmem:[%s5 + $0x14] sm:$0xf]
  %v692 = vld [vmem:[%s5 + $0x18] sm:$0xf]
  %v693 = vld [vmem:[%s5 + $0x1c] sm:$0xf]
  %v694 = vld [vmem:[%s5 + $0x20] sm:$0xf]
  %v695 = vld [vmem:[%s5 + $0x24] sm:$0xf]
  %v696 = vld [vmem:[%s5 + $0x28] sm:$0xf]
  %v697 = vld [vmem:[%s5 + $0x2c] sm:$0xf]
  %v698 = vld [vmem:[%s5 + $0x30] sm:$0xf]
  %v699 = vld [vmem:[%s5 + $0x34] sm:$0xf]
  %v700 = vld [vmem:[%s5 + $0x38] sm:$0xf]
  %v701 = vld [vmem:[%s5 + $0x3c] sm:$0xf]
  %v702 = vld [vmem:[%s5 + $0x40] sm:$0xf]
  %v703 = vld [vmem:[%s5 + $0x44] sm:$0xf]
  %v704 = vld [vmem:[%s5 + $0x48] sm:$0xf]
  %v705 = vld [vmem:[%s5 + $0x4c] sm:$0xf]
  %v706 = vld [vmem:[%s5 + $0x50] sm:$0xf]
  %v707 = vld [vmem:[%s5 + $0x54] sm:$0xf]
  %v708 = vld [vmem:[%s5 + $0x58] sm:$0xf]
  %v709 = vld [vmem:[%s5 + $0x5c] sm:$0xf]
  %v710 = vld [vmem:[%s5 + $0x60] sm:$0xf]
  %v711 = vld [vmem:[%s5 + $0x64] sm:$0xf]
  %v712 = vld [vmem:[%s5 + $0x68] sm:$0xf]
  %v713 = vld [vmem:[%s5 + $0x6c] sm:$0xf]
  %v714 = vld [vmem:[%s5 + $0x70] sm:$0xf]
  %v715 = vld [vmem:[%s5 + $0x74] sm:$0xf]
  %v716 = vld [vmem:[%s5 + $0x78] sm:$0xf]
  %v717 = vld [vmem:[%s5 + $0x7c] sm:$0xf]
  %v718 = vld [vmem:[%s5 + $0x80] sm:$0xf]
  %v719 = vld [vmem:[%s5 + $0x84] sm:$0xf]
  %v720 = vld [vmem:[%s5 + $0x88] sm:$0xf]
  %v721 = vld [vmem:[%s5 + $0x8c] sm:$0xf]
  %v722 = vld [vmem:[%s5 + $0x90] sm:$0xf]
  %v723 = vld [vmem:[%s5 + $0x94] sm:$0xf]
  %v724 = vld [vmem:[%s5 + $0x98] sm:$0xf]
  %v725 = vld [vmem:[%s5 + $0x9c] sm:$0xf]
  %v726 = vld [vmem:[%s5 + $0xa0] sm:$0xf]
  %v727 = vld [vmem:[%s5 + $0xa4] sm:$0xf]
  %v728 = vld [vmem:[%s5 + $0xa8] sm:$0xf]
  %v729 = vld [vmem:[%s5 + $0xac] sm:$0xf]
  %v730 = vld [vmem:[%s5 + $0xb0] sm:$0xf]
  %v731 = vld [vmem:[%s5 + $0xb4] sm:$0xf]
  %v732 = vld [vmem:[%s5 + $0xb8] sm:$0xf]
  %v733 = vld [vmem:[%s5 + $0xbc] sm:$0xf]
  %v734 = vld [vmem:[%s5 + $0xc0] sm:$0xf]
  %v735 = vld [vmem:[%s5 + $0xc4] sm:$0xf]
  %v736 = vld [vmem:[%s5 + $0xc8] sm:$0xf]
  %v737 = vld [vmem:[%s5 + $0xcc] sm:$0xf]
  %v738 = vld [vmem:[%s5 + $0xd0] sm:$0xf]
  %v739 = vld [vmem:[%s5 + $0xd4] sm:$0xf]
  %v740 = vld [vmem:[%s5 + $0xd8] sm:$0xf]
  %v741 = vld [vmem:[%s5 + $0xdc] sm:$0xf]
  %v742 = vld [vmem:[%s5 + $0xe0] sm:$0xf]
  %v743 = vld [vmem:[%s5 + $0xe4] sm:$0xf]
  %v744 = vld [vmem:[%s5 + $0xe8] sm:$0xf]
  %v745 = vld [vmem:[%s5 + $0xec] sm:$0xf]
  %v746 = vld [vmem:[%s5 + $0xf0] sm:$0xf]
  %v747 = vld [vmem:[%s5 + $0xf4] sm:$0xf]
  %v748 = vld [vmem:[%s5 + $0xf8] sm:$0xf]
  %v749 = vld [vmem:[%s5 + $0xfc] sm:$0xf]
  %v750 = vld [vmem:[%s6] sm:$0x1]
  %v752 = vlaneseq
  %v753 = vshrl.u32 %v752, 7
  %v754 = vsub.s32 0, %v753
  %v755 = vrot.slane %v750, %v754
  %v821 = vunpack.c.l.b16 %v686
  %v822 = vunpack.c.l.b16 %v687
  %v823 = vunpack.c.l.b16 %v688
  %v824 = vunpack.c.l.b16 %v689
  %v825 = vunpack.c.l.b16 %v690
  %v826 = vunpack.c.l.b16 %v691
  %v827 = vunpack.c.l.b16 %v692
  %v828 = vunpack.c.l.b16 %v693
  %v829 = vunpack.c.l.b16 %v694
  %v830 = vunpack.c.l.b16 %v695
  %v831 = vunpack.c.l.b16 %v696
  %v832 = vunpack.c.l.b16 %v697
  %v833 = vunpack.c.l.b16 %v698
  %v834 = vunpack.c.l.b16 %v699
  %v835 = vunpack.c.l.b16 %v700
  %v836 = vunpack.c.l.b16 %v701
  %v837 = vunpack.c.l.b16 %v702
  %v838 = vunpack.c.l.b16 %v703
  %v839 = vunpack.c.l.b16 %v704
  %v840 = vunpack.c.l.b16 %v705
  %v841 = vunpack.c.l.b16 %v706
  %v842 = vunpack.c.l.b16 %v707
  %v843 = vunpack.c.l.b16 %v708
  %v844 = vunpack.c.l.b16 %v709
  %v845 = vunpack.c.l.b16 %v710
  %v846 = vunpack.c.l.b16 %v711
  %v847 = vunpack.c.l.b16 %v712
  %v848 = vunpack.c.l.b16 %v713
  %v849 = vunpack.c.l.b16 %v714
  %v850 = vunpack.c.l.b16 %v715
  %v851 = vunpack.c.l.b16 %v716
  %v852 = vunpack.c.l.b16 %v717
  %v853 = vunpack.c.l.b16 %v718
  %v854 = vunpack.c.l.b16 %v719
  %v855 = vunpack.c.l.b16 %v720
  %v856 = vunpack.c.l.b16 %v721
  %v857 = vunpack.c.l.b16 %v722
  %v858 = vunpack.c.l.b16 %v723
  %v859 = vunpack.c.l.b16 %v724
  %v860 = vunpack.c.l.b16 %v725
  %v861 = vunpack.c.l.b16 %v726
  %v862 = vunpack.c.l.b16 %v727
  %v863 = vunpack.c.l.b16 %v728
  %v864 = vunpack.c.l.b16 %v729
  %v865 = vunpack.c.l.b16 %v730
  %v866 = vunpack.c.l.b16 %v731
  %v867 = vunpack.c.l.b16 %v732
  %v868 = vunpack.c.l.b16 %v733
  %v869 = vunpack.c.l.b16 %v734
  %v870 = vunpack.c.l.b16 %v735
  %v871 = vunpack.c.l.b16 %v736
  %v872 = vunpack.c.l.b16 %v737
  %v873 = vunpack.c.l.b16 %v738
  %v874 = vunpack.c.l.b16 %v739
  %v875 = vunpack.c.l.b16 %v740
  %v876 = vunpack.c.l.b16 %v741
  %v877 = vunpack.c.l.b16 %v742
  %v878 = vunpack.c.l.b16 %v743
  %v879 = vunpack.c.l.b16 %v744
  %v880 = vunpack.c.l.b16 %v745
  %v881 = vunpack.c.l.b16 %v746
  %v882 = vunpack.c.l.b16 %v747
  %v883 = vunpack.c.l.b16 %v748
  %v884 = vunpack.c.l.b16 %v749
  %v885 = vpack.c.b16 %v822, %v821
  %v886 = vpack.c.b16 %v824, %v823
  %v887 = vpack.c.b16 %v826, %v825
  %v888 = vpack.c.b16 %v828, %v827
  %v889 = vpack.c.b16 %v830, %v829
  %v890 = vpack.c.b16 %v832, %v831
  %v891 = vpack.c.b16 %v834, %v833
  %v892 = vpack.c.b16 %v836, %v835
  %v893 = vpack.c.b16 %v838, %v837
  %v894 = vpack.c.b16 %v840, %v839
  %v895 = vpack.c.b16 %v842, %v841
  %v896 = vpack.c.b16 %v844, %v843
  %v897 = vpack.c.b16 %v846, %v845
  %v898 = vpack.c.b16 %v848, %v847
  %v899 = vpack.c.b16 %v850, %v849
  %v900 = vpack.c.b16 %v852, %v851
  %v901 = vpack.c.b16 %v854, %v853
  %v902 = vpack.c.b16 %v856, %v855
  %v903 = vpack.c.b16 %v858, %v857
  %v904 = vpack.c.b16 %v860, %v859
  %v905 = vpack.c.b16 %v862, %v861
  %v906 = vpack.c.b16 %v864, %v863
  %v907 = vpack.c.b16 %v866, %v865
  %v908 = vpack.c.b16 %v868, %v867
  %v909 = vpack.c.b16 %v870, %v869
  %v910 = vpack.c.b16 %v872, %v871
  %v911 = vpack.c.b16 %v874, %v873
  %v912 = vpack.c.b16 %v876, %v875
  %v913 = vpack.c.b16 %v878, %v877
  %v914 = vpack.c.b16 %v880, %v879
  %v915 = vpack.c.b16 %v882, %v881
  %v916 = vpack.c.b16 %v884, %v883
  %949 = vmatprep.subr.bf16.mxu0 0
  %950 = vmatpush1.bf16.msra.mxu0 %v892
  %951 = vmatprep.subr.bf16.mxu0 0
  %952 = vmatpush1.bf16.msra.mxu0 %v891
  %953 = vmatprep.subr.bf16.mxu0 0
  %954 = vmatpush1.bf16.msra.mxu0 %v890
  %955 = vmatprep.subr.bf16.mxu0 0
  %956 = vmatpush1.bf16.msra.mxu0 %v889
  %957 = vmatprep.subr.bf16.mxu0 0
  %958 = vmatpush1.bf16.msra.mxu0 %v888
  %959 = vmatprep.subr.bf16.mxu0 0
  %960 = vmatpush1.bf16.msra.mxu0 %v887
  %961 = vmatprep.subr.bf16.mxu0 0
  %962 = vmatpush1.bf16.msra.mxu0 %v886
  %963 = vmatprep.subr.bf16.mxu0 0
  %964 = vmatpush1.bf16.msra.mxu0 %v885
  %965 = vmatprep.subr.bf16.mxu0 0
  %966 = vmatpush2.bf16.msra.mxu0 %v900
  %967 = vmatprep.subr.bf16.mxu0 0
  %968 = vmatpush2.bf16.msra.mxu0 %v899
  %969 = vmatprep.subr.bf16.mxu0 0
  %970 = vmatpush2.bf16.msra.mxu0 %v898
  %971 = vmatprep.subr.bf16.mxu0 0
  %972 = vmatpush2.bf16.msra.mxu0 %v897
  %973 = vmatprep.subr.bf16.mxu0 0
  %974 = vmatpush2.bf16.msra.mxu0 %v896
  %975 = vmatprep.subr.bf16.mxu0 0
  %976 = vmatpush2.bf16.msra.mxu0 %v895
  %977 = vmatprep.subr.bf16.mxu0 0
  %978 = vmatpush2.bf16.msra.mxu0 %v894
  %979 = vmatprep.subr.bf16.mxu0 0
  %980 = vmatpush2.bf16.msra.mxu0 %v893
  %981 = vmatprep.mubr.bf16.mxu0 %v683
  %982 = vmatmul.mubr.bf16.gmra.mxu0 %v682
  %v983 = vpop.f32.mrf.mxu0
  %v984 = vadd.f32 %v755, %v983
  %v985 = vpop.f32.mrf.mxu0
  %v986 = vpop.f32.mrf.mxu0
  %v987 = vpop.f32.mrf.mxu0
  %988 = vdwg.mxu0
  %989 = vmatprep.subr.bf16.mxu0 0
  %990 = vmatpush1.bf16.msra.mxu0 %v908
  %991 = vmatprep.subr.bf16.mxu0 0
  %992 = vmatpush1.bf16.msra.mxu0 %v907
  %993 = vmatprep.subr.bf16.mxu0 0
  %994 = vmatpush1.bf16.msra.mxu0 %v906
  %995 = vmatprep.subr.bf16.mxu0 0
  %996 = vmatpush1.bf16.msra.mxu0 %v905
  %997 = vmatprep.subr.bf16.mxu0 0
  %998 = vmatpush1.bf16.msra.mxu0 %v904
  %999 = vmatprep.subr.bf16.mxu0 0
  %1000 = vmatpush1.bf16.msra.mxu0 %v903
  %1001 = vmatprep.subr.bf16.mxu0 0
  %1002 = vmatpush1.bf16.msra.mxu0 %v902
  %1003 = vmatprep.subr.bf16.mxu0 0
  %1004 = vmatpush1.bf16.msra.mxu0 %v901
  %1005 = vmatprep.subr.bf16.mxu0 0
  %1006 = vmatpush2.bf16.msra.mxu0 %v916
  %1007 = vmatprep.subr.bf16.mxu0 0
  %1008 = vmatpush2.bf16.msra.mxu0 %v915
  %1009 = vmatprep.subr.bf16.mxu0 0
  %1010 = vmatpush2.bf16.msra.mxu0 %v914
  %1011 = vmatprep.subr.bf16.mxu0 0
  %1012 = vmatpush2.bf16.msra.mxu0 %v913
  %1013 = vmatprep.subr.bf16.mxu0 0
  %1014 = vmatpush2.bf16.msra.mxu0 %v912
  %1015 = vmatprep.subr.bf16.mxu0 0
  %1016 = vmatpush2.bf16.msra.mxu0 %v911
  %1017 = vmatprep.subr.bf16.mxu0 0
  %1018 = vmatpush2.bf16.msra.mxu0 %v910
  %1019 = vmatprep.subr.bf16.mxu0 0
  %1020 = vmatpush2.bf16.msra.mxu0 %v909
  %1021 = vmatprep.mubr.bf16.mxu0 %v685
  %1022 = vmatmul.mubr.bf16.gmra.mxu0 %v684
  %v1023 = vpop.f32.mrf.mxu0
  %v1024 = vadd.f32 %v984, %v1023
  %v1025 = vpop.f32.mrf.mxu0
  %v1026 = vpop.f32.mrf.mxu0
  %v1027 = vpop.f32.mrf.mxu0
  %1028 = vdwg.mxu0
  %1029 = vmax.xlane.f32.xlu0 %v1024
  %v1030 = vpop.xlane.xlu0 %1029
  %v1031 = vsub.f32 %v1024, %v1030
  %v1032 = vmul.f32 %v1031, 1.442695
  %v1033 = vpow.pop %v1032
  %v1034 = vld [vmem:[%s7] sm:$0xff]
  %v1035 = vld [vmem:[%s7 + $0x8] sm:$0xff]
  %v1036 = vld [vmem:[%s7 + $0x10] sm:$0xff]
  %v1037 = vld [vmem:[%s7 + $0x18] sm:$0xff]
  %v1038 = vld [vmem:[%s7 + $0x20] sm:$0xff]
  %v1039 = vld [vmem:[%s7 + $0x28] sm:$0xff]
  %v1040 = vld [vmem:[%s7 + $0x30] sm:$0xff]
  %v1041 = vld [vmem:[%s7 + $0x38] sm:$0xff]
  %v1042 = vld [vmem:[%s7 + $0x40] sm:$0xff]
  %v1043 = vld [vmem:[%s7 + $0x48] sm:$0xff]
  %v1044 = vld [vmem:[%s7 + $0x50] sm:$0xff]
  %v1045 = vld [vmem:[%s7 + $0x58] sm:$0xff]
  %v1046 = vld [vmem:[%s7 + $0x60] sm:$0xff]
  %v1047 = vld [vmem:[%s7 + $0x68] sm:$0xff]
  %v1048 = vld [vmem:[%s7 + $0x70] sm:$0xff]
  %v1049 = vld [vmem:[%s7 + $0x78] sm:$0xff]
  %1050 = vmatprep.subr.mxu0 0.0
  %1051 = vmatpush1.msra.mxu0 %v1049
  %1052 = vmatprep.subr.mxu0 0.0
  %1053 = vmatpush1.msra.mxu0 %v1048
  %1054 = vmatprep.subr.mxu0 0.0
  %1055 = vmatpush1.msra.mxu0 %v1047
  %1056 = vmatprep.subr.mxu0 0.0
  %1057 = vmatpush1.msra.mxu0 %v1046
  %1058 = vmatprep.subr.mxu0 0.0
  %1059 = vmatpush1.msra.mxu0 %v1045
  %1060 = vmatprep.subr.mxu0 0.0
  %1061 = vmatpush1.msra.mxu0 %v1044
  %1062 = vmatprep.subr.mxu0 0.0
  %1063 = vmatpush1.msra.mxu0 %v1043
  %1064 = vmatprep.subr.mxu0 0.0
  %1065 = vmatpush1.msra.mxu0 %v1042
  %1066 = vmatprep.subr.mxu0 0.0
  %1067 = vmatpush1.msra.mxu0 %v1041
  %1068 = vmatprep.subr.mxu0 0.0
  %1069 = vmatpush1.msra.mxu0 %v1040
  %1070 = vmatprep.subr.mxu0 0.0
  %1071 = vmatpush1.msra.mxu0 %v1039
  %1072 = vmatprep.subr.mxu0 0.0
  %1073 = vmatpush1.msra.mxu0 %v1038
  %1074 = vmatprep.subr.mxu0 0.0
  %1075 = vmatpush1.msra.mxu0 %v1037
  %1076 = vmatprep.subr.mxu0 0.0
  %1077 = vmatpush1.msra.mxu0 %v1036
  %1078 = vmatprep.subr.mxu0 0.0
  %1079 = vmatpush1.msra.mxu0 %v1035
  %1080 = vmatprep.subr.mxu0 0.0
  %1081 = vmatpush1.msra.mxu0 %v1034
  %1082 = vmatprep.subr.mxu0 0.0
  %1083 = vmatpush2.msra.mxu0 0.0
  %1084 = vmatprep.subr.mxu0 0.0
  %1085 = vmatpush2.msra.mxu0 0.0
  %1086 = vmatprep.subr.mxu0 0.0
  %1087 = vmatpush2.msra.mxu0 0.0
  %1088 = vmatprep.subr.mxu0 0.0
  %1089 = vmatpush2.msra.mxu0 0.0
  %1090 = vmatprep.subr.mxu0 0.0
  %1091 = vmatpush2.msra.mxu0 0.0
  %1092 = vmatprep.subr.mxu0 0.0
  %1093 = vmatpush2.msra.mxu0 0.0
  %1094 = vmatprep.subr.mxu0 0.0
  %1095 = vmatpush2.msra.mxu0 0.0
  %1096 = vmatprep.subr.mxu0 0.0
  %1097 = vmatpush2.msra.mxu0 0.0
  %1098 = vmatprep.subr.mxu0 0.0
  %1099 = vmatpush2.msra.mxu0 0.0
  %1100 = vmatprep.subr.mxu0 0.0
  %1101 = vmatpush2.msra.mxu0 0.0
  %1102 = vmatprep.subr.mxu0 0.0
  %1103 = vmatpush2.msra.mxu0 0.0
  %1104 = vmatprep.subr.mxu0 0.0
  %1105 = vmatpush2.msra.mxu0 0.0
  %1106 = vmatprep.subr.mxu0 0.0
  %1107 = vmatpush2.msra.mxu0 0.0
  %1108 = vmatprep.subr.mxu0 0.0
  %1109 = vmatpush2.msra.mxu0 0.0
  %1110 = vmatprep.subr.mxu0 0.0
  %1111 = vmatpush2.msra.mxu0 0.0
  %1112 = vmatprep.subr.mxu0 0.0
  %1113 = vmatpush2.msra.mxu0 0.0
  %1114 = vmatprep.mubr.f32.mxu0 0.0
  %1115 = vmatmul.mubr.f32.gmra.mxu0 %v1033
  %v1116 = vpop.f32.mrf.mxu0
  %v1117 = vadd.f32 0.0, %v1116
  %v1118 = vpop.f32.mrf.mxu0
  %1119 = vdwg.mxu0
  %v1120 = vrcp.pop %v1117
  %v1121 = vmul.f32 %v1033, %v1120
  %1122 = vst [vmem:[%s8] sm:$0xff] %v1121
  // Predicated region
  $region34: #{generator_forward.1} parent=0 // pred_check
    _
  $region35: #{generator_forward.1} parent=0 // pred_check_branch
    %1124 = sbr.rel (0) target = $region37
  $region36: #{generator_forward.1} parent=0 // pred_region
    _
  $region37: #{generator_forward.1} parent=0 // pred_fallthru
    _
  // Predicated region
  $region38: #{generator_forward.1} parent=0 // pred_check
    _
  $region39: #{generator_forward.1} parent=0 // pred_check_branch
    %1126 = sbr.rel (0) target = $region41
  $region40: #{generator_forward.1} parent=0 // pred_region
    _
  $region41: #{generator_forward.1} parent=0 // pred_fallthru
    _

</llo_original>
